<compile_context>
chip_gen: v5e
topology: v5e:2x2
jax: 0.10.0
libtpu: 0.0.40
codegen_flags: <defaults>
</compile_context>

<pallas_src>
import math

import jax
import jax.numpy as jnp
from jax.experimental import pallas as pl
from jax.experimental.pallas import tpu as pltpu

_TWO_PI = 2.0 * math.pi


def _sincos_kernel(x_ref, w2pi_ref, out_ref):
    # x_ref:    (1, TILE_B)  original timesteps (lane-dense)
    # w2pi_ref: (H, 1)       weights * 2*pi
    # out_ref:  (2, H, TILE_B)  [0]=sin plane, [1]=cos plane
    freqs = w2pi_ref[...] * x_ref[...]            # (H,1)*(1,TB) -> (H, TB)
    out_ref[0] = jnp.sin(freqs).astype(out_ref.dtype)
    out_ref[1] = jnp.cos(freqs).astype(out_ref.dtype)


def _round_up(n, m):
    return ((n + m - 1) // m) * m


def random_or_learned_sinusoidal_pos_emb(x, weights, *, tile_b=32768,
                                         use_pallas=None,
                                         out_dtype=jnp.float32):
    """x: (B,), weights: (half_dim,) -> (B, 1 + 2*half_dim)."""
    assert x.ndim == 1
    assert weights.ndim == 1
    b = x.shape[0]
    half_dim = weights.shape[0]

    xf = x.astype(jnp.float32)
    wf = weights.astype(jnp.float32)

    if use_pallas is None:
        # Tiny problems: pallas_call launch + DMA setup dwarfs the compute.
        use_pallas = b * half_dim >= (1 << 16)

    if not use_pallas:
        freqs = xf[:, None] * wf[None, :] * _TWO_PI
        return jnp.concatenate(
            [xf[:, None], jnp.sin(freqs), jnp.cos(freqs)], axis=-1
        ).astype(out_dtype)

    # --- tile selection -----------------------------------------------------
    out_bytes = jnp.dtype(out_dtype).itemsize
    # Keep the double-buffered output block under ~24 MiB so Buffered(2)
    # pipelining survives v7x's 32 MiB scoped-VMEM default.
    max_tb_vmem = (24 * 1024 * 1024) // max(1, 2 * half_dim * out_bytes * 2)
    tb = min(tile_b, max_tb_vmem, _round_up(b, 128))
    tb = max(128, (tb // 128) * 128)          # lane-dense tiles (multiple of 128)
    b_pad = _round_up(b, tb)

    # --- kernel inputs (transposed layout: batch on lanes) -------------------
    x_row = jnp.zeros((1, b_pad), jnp.float32).at[0, :b].set(xf)
    w2pi = (wf * _TWO_PI).reshape(half_dim, 1)

    sc = pl.pallas_call(
        _sincos_kernel,
        out_shape=jax.ShapeDtypeStruct((2, half_dim, b_pad), out_dtype),
        grid=(b_pad // tb,),
        in_specs=[
            pl.BlockSpec((1, tb), lambda i: (0, i)),
            pl.BlockSpec((half_dim, 1), lambda i: (0, 0)),
        ],
        out_specs=pl.BlockSpec((2, half_dim, tb), lambda i: (0, 0, i)),
        compiler_params=pltpu.CompilerParams(
            dimension_semantics=("parallel",)),
    )(x_row, w2pi)

    # Layout plumbing back to the PyTorch (B, 1+dim) output (wrapper-side).
    # TODO(synk): if this feeds the usual time-MLP, skip this transpose/concat
    # and apply the downstream Linear directly to the (2H, B) kernel output.
    fourier = jnp.reshape(sc[:, :, :b], (2 * half_dim, b)).T   # (B, 2*half_dim)
    return jnp.concatenate(
        [xf[:, None].astype(out_dtype), fourier], axis=-1)


if __name__ == "__main__":
    key = jax.random.PRNGKey(0)
    k_x, k_w = jax.random.split(key)

    dim = 16                       # must be even; half_dim = 8
    half_dim = dim // 2
    batch = 8

    # deterministic "parameter" init (matches torch.randn(half_dim) semantics)
    weights = jax.random.normal(k_w, (half_dim,), dtype=jnp.float32)
    # continuous-time timesteps in [0, 1) (as in the crowsonkb v-diffusion setup)
    x = jax.random.uniform(k_x, (batch,), dtype=jnp.float32)

    # Force the Pallas path so the kernel itself is exercised at demo sizes.
    out = random_or_learned_sinusoidal_pos_emb(x, weights, use_pallas=True)
    out = jax.block_until_ready(out)

    # reference check in plain JAX (same op order as the PyTorch module)
    freqs_ref = x[:, None] * weights[None, :] * 2.0 * math.pi
    ref = jnp.concatenate(
        [x[:, None], jnp.sin(freqs_ref), jnp.cos(freqs_ref)], axis=-1
    )
    assert out.shape == (batch, 1 + dim)
    assert jnp.allclose(out, ref, atol=1e-4, rtol=1e-4), \
        float(jnp.max(jnp.abs(out - ref)))

    print("KERNEL_OK")
</pallas_src>

<mosaic_0001>
module attributes {stable_mosaic.version = 11 : i64} {
  func.func @_sincos_kernel(%arg0: i32, %arg1: memref<1x128xf32, #tpu.memory_space<vmem>>, %arg2: memref<8x1xf32, #tpu.memory_space<vmem>>, %arg3: memref<2x8x128xf32, #tpu.memory_space<vmem>>) attributes {dimension_semantics = [#tpu.dimension_semantics<parallel>], iteration_bounds = array<i64: 1>, scalar_prefetch = 0 : i64, scratch_operands = 0 : i64, tpu.core_type = #tpu.core_type<tc>, window_params = [{transform_indices = @transform_0, window_bounds = array<i64: 1, 128>}, {pipeline_mode = #tpu.pipeline_mode<synchronous>, transform_indices = @transform_1, window_bounds = array<i64: 8, 1>}, {transform_indices = @transform_2, window_bounds = array<i64: 2, 8, 128>}]} {
    %c0 = arith.constant 0 : index
    %c0_0 = arith.constant 0 : index
    %0 = vector.load %arg2[%c0, %c0_0] : memref<8x1xf32, #tpu.memory_space<vmem>>, vector<8x1xf32>
    %c0_1 = arith.constant 0 : index
    %c0_2 = arith.constant 0 : index
    %1 = vector.load %arg1[%c0_1, %c0_2] : memref<1x128xf32, #tpu.memory_space<vmem>>, vector<1x128xf32>
    %2 = vector.broadcast %0 : vector<8x1xf32> to vector<8x128xf32>
    %3 = vector.broadcast %1 : vector<1x128xf32> to vector<8x128xf32>
    %4 = arith.mulf %2, %3 : vector<8x128xf32>
    %5 = math.sin %4 : vector<8x128xf32>
    %c0_3 = arith.constant 0 : index
    %c0_4 = arith.constant 0 : index
    %c0_5 = arith.constant 0 : index
    %6 = vector.load %arg3[%c0_3, %c0_4, %c0_5] : memref<2x8x128xf32, #tpu.memory_space<vmem>>, vector<1x8x128xf32>
    %7 = vector.shape_cast %6 : vector<1x8x128xf32> to vector<8x128xf32>
    %8 = vector.shape_cast %5 : vector<8x128xf32> to vector<1x8x128xf32>
    tpu.vector_store %arg3[%c0_3, %c0_4, %c0_5], %8 {strides = array<i32>} : memref<2x8x128xf32, #tpu.memory_space<vmem>>, vector<1x8x128xf32>,
    %9 = math.cos %4 : vector<8x128xf32>
    %c1 = arith.constant 1 : index
    %c0_6 = arith.constant 0 : index
    %c0_7 = arith.constant 0 : index
    %10 = vector.load %arg3[%c1, %c0_6, %c0_7] : memref<2x8x128xf32, #tpu.memory_space<vmem>>, vector<1x8x128xf32>
    %11 = vector.shape_cast %10 : vector<1x8x128xf32> to vector<8x128xf32>
    %12 = vector.shape_cast %9 : vector<8x128xf32> to vector<1x8x128xf32>
    tpu.vector_store %arg3[%c1, %c0_6, %c0_7], %12 {strides = array<i32>} : memref<2x8x128xf32, #tpu.memory_space<vmem>>, vector<1x8x128xf32>,
    return
  }
  func.func @transform_0(%arg0: i32) -> (i32, i32) {
    %c0_i32 = arith.constant 0 : i32
    %c0_i32_0 = arith.constant 0 : i32
    return %c0_i32, %arg0 : i32, i32
  }
  func.func @transform_1(%arg0: i32) -> (i32, i32) {
    %c0_i32 = arith.constant 0 : i32
    %c0_i32_0 = arith.constant 0 : i32
    %c0_i32_1 = arith.constant 0 : i32
    return %c0_i32, %c0_i32_0 : i32, i32
  }
  func.func @transform_2(%arg0: i32) -> (i32, i32, i32) {
    %c0_i32 = arith.constant 0 : i32
    %c0_i32_0 = arith.constant 0 : i32
    %c0_i32_1 = arith.constant 0 : i32
    return %c0_i32, %c0_i32_0, %arg0 : i32, i32, i32
  }
}

</mosaic_0001>

<llo_original>
// kernel: tpu_custom_call.1
$region0: #{tpu_custom_call.1}
  #allocation0 [shape = 'u32[]', space=smem, size = 0x4, offset = 0x4, fixed_abs, tag = 'smem constant byte address 0x4 - core index']
  #allocation1 [shape = 'u32[72,128]{1,0:T(1,128)}', space=vmem, size = 0x9000, scoped, tag = 'internal scratch']
  %s0 = inlined_call_operand.vmem [shape: f32[1,128], index: 0, kind: input, shape index: {}]
  %s1 = inlined_call_operand.vmem [shape: f32[8,1], index: 1, kind: input, shape index: {}]
  %s2 = inlined_call_operand.hbm [shape: f32[2,8,128], index: 2, kind: output, shape index: {}]
  %s3 = sld [smem:[#allocation0]]
  $region18: #{tpu_custom_call.1} parent=0
    _
  %s5 = ssub.s32 1, %s3
  %s6 = scalar_select 0, %s5, %s3
  $region1: #{tpu_custom_call.1} parent=0
    #allocation2 [shape = 'u8[8192]{0}', space=vmem, size = 0x2000, scoped, tag = 'output window, operand 0, single buffered']
    #allocation3 [shape = 's32[1]{0}', space=sflag, size = 0x4, scoped, tag = 'scoped memory for tpu_custom_call.1']
    %7 = vsyncpa [#allocation3], 0
    // Predicated region
    $region2: #{tpu_custom_call.1} parent=1 // pred_check
      _
    $region3: #{tpu_custom_call.1} parent=1 // pred_check_branch
      %9 = sbr.rel (0) target = $region5
    $region4: #{tpu_custom_call.1} parent=1 // pred_region
      _
    $region5: #{tpu_custom_call.1} parent=1 // pred_fallthru
      _
    // Predicated region
    $region6: #{tpu_custom_call.1} parent=1 // pred_check
      _
    $region7: #{tpu_custom_call.1} parent=1 // pred_check_branch
      %11 = sbr.rel (0) target = $region9
    $region8: #{tpu_custom_call.1} parent=1 // pred_region
      _
    $region9: #{tpu_custom_call.1} parent=1 // pred_fallthru
      _
    %v12 = vld [vmem:[%s1] sm:$0xff]
    %v13 = vld [vmem:[%s0] sm:$0x1]
    %15 = vset.pattern.permute.xlu0 0
    %16 = vperm.xlu0 %15, %v12
    %v17 = vpop.permute.xlu0 %16
    %v20 = vperm.slane %v13, 0
    %v22 = vmul.f32 %v17, %v20
    %v23 = vand.u32 2147483647, %v22
    %vm24 = vcmp.le.f32.partialorder %v23, 0.7853982
    %vm25 = vcmp.lt.s32.totalorder %v22, 0
    %v26 = vand.u32 %v22, 2139095040
    %v27 = vshrl.u32 %v26, 23
    %v28 = vsub.s32 %v27, 127
    %v29 = vand.u32 2147483647, %v22
    %v30 = vand.u32 %v29, 8388607
    %v31 = vor.u32 %v30, 8388608
    %v32 = vsub.s32 0, %v31
    %v33 = vadd.s32 %v28, 1
    %vm34 = vcmp.gt.s32.totalorder %v33, 0
    %v35 = vsel %vm34, %v33, 0
    %v36 = vshrl.u32 %v35, 5
    %v37 = vand.u32 %v35, 31
    %v38 = vsub.s32 32, %v37
    %v39 = vshrl.u32 683565275, %v38
    %v40 = vshll.u32 683565275, %v37
    %v41 = vshrl.u32 2475754826, %v38
    %v42 = vor.u32 %v40, %v41
    %v43 = vshll.u32 2475754826, %v37
    %v44 = vshrl.u32 2131351028, %v38
    %v45 = vor.u32 %v43, %v44
    %v46 = vshll.u32 2131351028, %v37
    %v47 = vshrl.u32 2102212464, %v38
    %v48 = vor.u32 %v46, %v47
    %v49 = vshll.u32 2102212464, %v37
    %v50 = vshrl.u32 920167782, %v38
    %v51 = vor.u32 %v49, %v50
    %v52 = vshll.u32 920167782, %v37
    %v53 = vshrl.u32 1326507024, %v38
    %v54 = vor.u32 %v52, %v53
    %vm55 = vcmp.lt.s32.totalorder %v36, 1
    %vm56 = vcmp.lt.s32.totalorder %v36, 2
    %vm57 = vcmp.lt.s32.totalorder %v36, 3
    %vm58 = vcmp.lt.s32.totalorder %v36, 4
    %v59 = vsel %vm55, %v39, %v42
    %v60 = vsel %vm58, %v48, 2102212464
    %v61 = vsel %vm57, %v45, %v60
    %v62 = vsel %vm56, %v59, %v61
    %v63 = vsel %vm55, %v42, %v45
    %v64 = vsel %vm58, %v51, 920167782
    %v65 = vsel %vm57, %v48, %v64
    %v66 = vsel %vm56, %v63, %v65
    %v67 = vsel %vm55, %v45, %v48
    %v68 = vsel %vm58, %v54, 1326507024
    %v69 = vsel %vm57, %v51, %v68
    %v70 = vsel %vm56, %v67, %v69
    %v71 = vshll.u32 %v31, 8
    %v72 = vand.u32 %v71, 65535
    %v73 = vshrl.u32 %v71, 16
    %v74 = vand.u32 %v70, 65535
    %v75 = vshrl.u32 %v70, 16
    %v76 = vmul.u32 %v72, %v74
    %v77 = vmul.u32 %v72, %v75
    %v78 = vmul.u32 %v73, %v74
    %v79 = vmul.u32 %v73, %v75
    %v80 = vshll.u32 %v77, 16
    %v81 = vshrl.u32 %v77, 16
    %v82 = vshll.u32 %v78, 16
    %v83 = vshrl.u32 %v78, 16
    %vm84 = vc.u32 %v76, %v80
    %v85 = vsel %vm84, 1, 0
    %v86 = vadd.s32 %v76, %v80
    %v87 = vadd.s32 %v79, %v85
    %vm88 = vc.u32 %v86, %v82
    %v89 = vsel %vm88, 1, 0
    %v90 = vadd.s32 %v86, %v82
    %v91 = vadd.s32 %v87, %v89
    %v92 = vadd.s32 %v91, %v81
    %v93 = vadd.s32 %v92, %v83
    %v94 = vand.u32 %v71, 65535
    %v95 = vshrl.u32 %v71, 16
    %v96 = vand.u32 %v66, 65535
    %v97 = vshrl.u32 %v66, 16
    %v98 = vmul.u32 %v94, %v96
    %v99 = vmul.u32 %v94, %v97
    %v100 = vmul.u32 %v95, %v96
    %v101 = vmul.u32 %v95, %v97
    %v102 = vshll.u32 %v99, 16
    %v103 = vshrl.u32 %v99, 16
    %v104 = vshll.u32 %v100, 16
    %v105 = vshrl.u32 %v100, 16
    %vm106 = vc.u32 %v98, %v102
    %v107 = vsel %vm106, 1, 0
    %v108 = vadd.s32 %v98, %v102
    %v109 = vadd.s32 %v101, %v107
    %vm110 = vc.u32 %v108, %v104
    %v111 = vsel %vm110, 1, 0
    %v112 = vadd.s32 %v108, %v104
    %v113 = vadd.s32 %v109, %v111
    %v114 = vadd.s32 %v113, %v103
    %v115 = vadd.s32 %v114, %v105
    %v116 = vmul.u32 %v71, %v62
    %v117 = vadd.s32 %v93, %v112
    %vm118 = vc.u32 %v93, %v112
    %v119 = vadd.s32 %v115, 1
    %v120 = vsel %vm118, %v119, %v115
    %v121 = vadd.s32 %v116, %v120
    %v122 = vadd.s32 %v121, 536870912
    %v123 = vshrl.u32 %v122, 30
    %v124 = vshll.u32 %v123, 30
    %v125 = vsub.s32 %v121, %v124
    %vm126 = vcmp.lt.s32.totalorder %v125, 0
    %v127 = vsub.s32 0, %v125
    %v128 = vsel %vm126, %v127, %v125
    %v129 = vclz %v128
    %v130 = vsub.s32 %v129, 2
    %vm131 = vcmp.gt.s32.totalorder 0, %v130
    %v132 = vsel %vm131, 0, %v130
    %v133 = vsub.s32 32, %v132
    %v134 = vshll.u32 %v125, %v132
    %v135 = vshrl.u32 %v117, %v133
    %v136 = vor.u32 %v134, %v135
    %v137 = vsub.s32 4294967266, %v132
    %v138 = vadd.s32 %v137, 127
    %v139 = vshll.u32 %v138, 23
    %v140 = vor.u32 4788187, %v139
    %v141 = vand.u32 2147483647, %v140
    %v143 = vcvt.s32.f32 %v136
    %v144 = vmul.f32 %v143, %v141
    %v145 = vxor.u32 %v144, 2147483648
    %v146 = vsel %vm25, %v145, %v144
    %v147 = vsub.s32 4, %v123
    %v148 = vsel %vm25, %v147, %v123
    %v149 = vsel %vm24, %v22, %v146
    %v150 = vsel %vm24, 0, %v148
    %v151 = vmul.f32 %v149, %v149
    %v152 = vmul.f32 %v151, -0.001358992
    %v153 = vadd.f32 %v152, 0.041655596
    %v154 = vmul.f32 %v151, %v153
    %v155 = vadd.f32 %v154, -0.4999988
    %v156 = vmul.f32 %v151, %v155
    %v157 = vadd.f32 1.0, %v156
    %v158 = vmul.f32 %v149, %v149
    %v159 = vmul.f32 %v158, -0.00019511016
    %v160 = vadd.f32 %v159, 0.008332121
    %v161 = vmul.f32 %v158, %v160
    %v162 = vadd.f32 %v161, -0.16666654
    %v163 = vmul.f32 %v158, %v162
    %v164 = vadd.f32 %v163, 1.0
    %v165 = vmul.f32 %v164, %v149
    %vm166 = vweird.f32 %v22
    %v167 = vadd.s32 %v150, 3
    %v168 = vand.u32 %v167, 3
    %vm169 = vcmp.lt.s32.totalorder %v168, 2
    %vm170 = vcmp.eq.s32.totalorder %v168, 0
    %v171 = vxor.u32 %v165, 2147483648
    %v172 = vsel %vm170, %v157, %v171
    %vm173 = vcmp.eq.s32.totalorder %v168, 2
    %v174 = vxor.u32 %v157, 2147483648
    %v175 = vsel %vm173, %v174, %v165
    %v176 = vsel %vm169, %v172, %v175
    %v177 = vsel %vm166, nan, %v176
    %178 = vst [vmem:[#allocation2] sm:$0xff] %v177
    %v179 = vand.u32 2147483647, %v22
    %vm180 = vcmp.le.f32.partialorder %v179, 0.7853982
    %vm181 = vcmp.lt.s32.totalorder %v22, 0
    %v182 = vand.u32 %v22, 2139095040
    %v183 = vshrl.u32 %v182, 23
    %v184 = vsub.s32 %v183, 127
    %v185 = vand.u32 2147483647, %v22
    %v186 = vand.u32 %v185, 8388607
    %v187 = vor.u32 %v186, 8388608
    %v188 = vsub.s32 0, %v187
    %v189 = vadd.s32 %v184, 1
    %vm190 = vcmp.gt.s32.totalorder %v189, 0
    %v191 = vsel %vm190, %v189, 0
    %v192 = vshrl.u32 %v191, 5
    %v193 = vand.u32 %v191, 31
    %v194 = vsub.s32 32, %v193
    %v195 = vshrl.u32 683565275, %v194
    %v196 = vshll.u32 683565275, %v193
    %v197 = vshrl.u32 2475754826, %v194
    %v198 = vor.u32 %v196, %v197
    %v199 = vshll.u32 2475754826, %v193
    %v200 = vshrl.u32 2131351028, %v194
    %v201 = vor.u32 %v199, %v200
    %v202 = vshll.u32 2131351028, %v193
    %v203 = vshrl.u32 2102212464, %v194
    %v204 = vor.u32 %v202, %v203
    %v205 = vshll.u32 2102212464, %v193
    %v206 = vshrl.u32 920167782, %v194
    %v207 = vor.u32 %v205, %v206
    %v208 = vshll.u32 920167782, %v193
    %v209 = vshrl.u32 1326507024, %v194
    %v210 = vor.u32 %v208, %v209
    %vm211 = vcmp.lt.s32.totalorder %v192, 1
    %vm212 = vcmp.lt.s32.totalorder %v192, 2
    %vm213 = vcmp.lt.s32.totalorder %v192, 3
    %vm214 = vcmp.lt.s32.totalorder %v192, 4
    %v215 = vsel %vm211, %v195, %v198
    %v216 = vsel %vm214, %v204, 2102212464
    %v217 = vsel %vm213, %v201, %v216
    %v218 = vsel %vm212, %v215, %v217
    %v219 = vsel %vm211, %v198, %v201
    %v220 = vsel %vm214, %v207, 920167782
    %v221 = vsel %vm213, %v204, %v220
    %v222 = vsel %vm212, %v219, %v221
    %v223 = vsel %vm211, %v201, %v204
    %v224 = vsel %vm214, %v210, 1326507024
    %v225 = vsel %vm213, %v207, %v224
    %v226 = vsel %vm212, %v223, %v225
    %v227 = vshll.u32 %v187, 8
    %v228 = vand.u32 %v227, 65535
    %v229 = vshrl.u32 %v227, 16
    %v230 = vand.u32 %v226, 65535
    %v231 = vshrl.u32 %v226, 16
    %v232 = vmul.u32 %v228, %v230
    %v233 = vmul.u32 %v228, %v231
    %v234 = vmul.u32 %v229, %v230
    %v235 = vmul.u32 %v229, %v231
    %v236 = vshll.u32 %v233, 16
    %v237 = vshrl.u32 %v233, 16
    %v238 = vshll.u32 %v234, 16
    %v239 = vshrl.u32 %v234, 16
    %vm240 = vc.u32 %v232, %v236
    %v241 = vsel %vm240, 1, 0
    %v242 = vadd.s32 %v232, %v236
    %v243 = vadd.s32 %v235, %v241
    %vm244 = vc.u32 %v242, %v238
    %v245 = vsel %vm244, 1, 0
    %v246 = vadd.s32 %v242, %v238
    %v247 = vadd.s32 %v243, %v245
    %v248 = vadd.s32 %v247, %v237
    %v249 = vadd.s32 %v248, %v239
    %v250 = vand.u32 %v227, 65535
    %v251 = vshrl.u32 %v227, 16
    %v252 = vand.u32 %v222, 65535
    %v253 = vshrl.u32 %v222, 16
    %v254 = vmul.u32 %v250, %v252
    %v255 = vmul.u32 %v250, %v253
    %v256 = vmul.u32 %v251, %v252
    %v257 = vmul.u32 %v251, %v253
    %v258 = vshll.u32 %v255, 16
    %v259 = vshrl.u32 %v255, 16
    %v260 = vshll.u32 %v256, 16
    %v261 = vshrl.u32 %v256, 16
    %vm262 = vc.u32 %v254, %v258
    %v263 = vsel %vm262, 1, 0
    %v264 = vadd.s32 %v254, %v258
    %v265 = vadd.s32 %v257, %v263
    %vm266 = vc.u32 %v264, %v260
    %v267 = vsel %vm266, 1, 0
    %v268 = vadd.s32 %v264, %v260
    %v269 = vadd.s32 %v265, %v267
    %v270 = vadd.s32 %v269, %v259
    %v271 = vadd.s32 %v270, %v261
    %v272 = vmul.u32 %v227, %v218
    %v273 = vadd.s32 %v249, %v268
    %vm274 = vc.u32 %v249, %v268
    %v275 = vadd.s32 %v271, 1
    %v276 = vsel %vm274, %v275, %v271
    %v277 = vadd.s32 %v272, %v276
    %v278 = vadd.s32 %v277, 536870912
    %v279 = vshrl.u32 %v278, 30
    %v280 = vshll.u32 %v279, 30
    %v281 = vsub.s32 %v277, %v280
    %vm282 = vcmp.lt.s32.totalorder %v281, 0
    %v283 = vsub.s32 0, %v281
    %v284 = vsel %vm282, %v283, %v281
    %v285 = vclz %v284
    %v286 = vsub.s32 %v285, 2
    %vm287 = vcmp.gt.s32.totalorder 0, %v286
    %v288 = vsel %vm287, 0, %v286
    %v289 = vsub.s32 32, %v288
    %v290 = vshll.u32 %v281, %v288
    %v291 = vshrl.u32 %v273, %v289
    %v292 = vor.u32 %v290, %v291
    %v293 = vsub.s32 4294967266, %v288
    %v294 = vadd.s32 %v293, 127
    %v295 = vshll.u32 %v294, 23
    %v296 = vor.u32 4788187, %v295
    %v297 = vand.u32 2147483647, %v296
    %v299 = vcvt.s32.f32 %v292
    %v300 = vmul.f32 %v299, %v297
    %v301 = vxor.u32 %v300, 2147483648
    %v302 = vsel %vm181, %v301, %v300
    %v303 = vsub.s32 4, %v279
    %v304 = vsel %vm181, %v303, %v279
    %v305 = vsel %vm180, %v22, %v302
    %v306 = vsel %vm180, 0, %v304
    %v307 = vmul.f32 %v305, %v305
    %v308 = vmul.f32 %v307, -0.001358992
    %v309 = vadd.f32 %v308, 0.041655596
    %v310 = vmul.f32 %v307, %v309
    %v311 = vadd.f32 %v310, -0.4999988
    %v312 = vmul.f32 %v307, %v311
    %v313 = vadd.f32 1.0, %v312
    %v314 = vmul.f32 %v305, %v305
    %v315 = vmul.f32 %v314, -0.00019511016
    %v316 = vadd.f32 %v315, 0.008332121
    %v317 = vmul.f32 %v314, %v316
    %v318 = vadd.f32 %v317, -0.16666654
    %v319 = vmul.f32 %v314, %v318
    %v320 = vadd.f32 %v319, 1.0
    %v321 = vmul.f32 %v320, %v305
    %vm322 = vweird.f32 %v22
    %v323 = vand.u32 %v306, 3
    %vm324 = vcmp.lt.s32.totalorder %v323, 2
    %vm325 = vcmp.eq.s32.totalorder %v323, 0
    %v326 = vxor.u32 %v321, 2147483648
    %v327 = vsel %vm325, %v313, %v326
    %vm328 = vcmp.eq.s32.totalorder %v323, 2
    %v329 = vxor.u32 %v313, 2147483648
    %v330 = vsel %vm328, %v329, %v321
    %v331 = vsel %vm324, %v327, %v330
    %v332 = vsel %vm322, nan, %v331
    %s333 = scalar_lea.vmem [#allocation2], 8
    %334 = vst [vmem:[%s333] sm:$0xff] %v332
    // Predicated region
    $region10: #{tpu_custom_call.1} parent=1 // pred_check
      _
    $region11: #{tpu_custom_call.1} parent=1 // pred_check_branch
      %336 = sbr.rel (0) target = $region13
    $region12: #{tpu_custom_call.1} parent=1 // pred_region
      %338 = vsyncadd [#allocation3], 0
      %s339 = sshll.u32 [#allocation2], 4
      %s340 = int_to_ptr.vmem [resolvable:$true] %s339
      %s341 = sshll.u32 %s2, 4
      %s342 = int_to_ptr.hbm [resolvable:$true] %s341
      %347 = dma.vmem_to_hbm [thread:$0]  %s340, 256, %s342, [#allocation3], 128, 128, 8
    $region13: #{tpu_custom_call.1} parent=1 // pred_fallthru
      _
    // Predicated region
    $region14: #{tpu_custom_call.1} parent=1 // pred_check
      _
    $region15: #{tpu_custom_call.1} parent=1 // pred_check_branch
      %349 = sbr.rel (0) target = $region17
    $region16: #{tpu_custom_call.1} parent=1 // pred_region
      %351 = dma.done [#allocation3], 256
    $region17: #{tpu_custom_call.1} parent=1 // pred_fallthru
      _
    %352 = vsyncpa [#allocation3], 1

</llo_original>
